<compile_context>
chip_gen: v5e
topology: v5e:2x2
jax: 0.10.0
libtpu: 0.0.40
codegen_flags: <defaults>
</compile_context>

<pallas_src>
import functools

import jax
import jax.numpy as jnp
from jax.experimental import pallas as pl
from jax.experimental.pallas import tpu as pltpu


def _conv1x1_pad1_add_kernel(x_ref, w_ref, b_ref, other_ref, o_ref, *,
                             h, w, wp, cin):
    # x_ref:     (Cin,  H*W)    unpadded interior pixels, channels-major
    # w_ref:     (Cout, Cin)    1x1 conv weight
    # b_ref:     (Cout, 1)      conv bias
    # other_ref: (Cout, Hp*Wp)  addend, flattened over the padded spatial dims
    # o_ref:     (Cout, Hp*Wp)  aliased with other's HBM buffer

    # Fold the bias once; single lane-dense blanket store covers the border
    # (where the conv contribution is exactly the bias).
    ob = other_ref[...] + b_ref[...]                      # (Cout, Hp*Wp) f32
    o_ref[...] = ob.astype(o_ref.dtype)

    # 1x1 conv on the unpadded interior as Cin broadcast FMAs on the VPU.
    # ((8,4)x(4,256) would fill <1% of the MXU and pay push/fill/pop latency.)
    x = x_ref[...]                                        # (Cin, H*W)
    wmat = w_ref[...]                                     # (Cout, Cin)
    conv = wmat[:, 0:1] * x[0:1, :]
    for c in range(1, cin):                               # static, unrolled
        conv = conv + wmat[:, c:c + 1] * x[c:c + 1, :]    # (Cout, H*W)

    # Interior scatter: row r of the interior starts at flat offset
    # (r + 1) * Wp + 1.  All RHS operands are sliced from values already in
    # vregs — no Ref re-loads inside the loop.
    for r in range(h):                                    # static, unrolled
        dst = (r + 1) * wp + 1
        o_ref[:, dst:dst + w] = (conv[:, r * w:(r + 1) * w]
                                 + ob[:, dst:dst + w]).astype(o_ref.dtype)


def conv1x1_pad1_add(x1, weight, bias, other):
    """x1: (1, Cin, H, W); weight: (Cout, Cin, 1, 1); bias: (Cout,);
    other: (1, Cout, H+2, W+2).  Returns (1, Cout, H+2, W+2)."""
    n, cin, h, w = x1.shape
    cout = weight.shape[0]
    hp, wp = h + 2, w + 2
    p = hp * wp
    assert n == 1, "kernel assumes batch size 1 (as in the reference module)"
    assert other.shape == (n, cout, hp, wp)

    x_flat = x1.reshape(cin, h * w)          # contiguous reshape (free)
    other_flat = other.reshape(cout, p)      # contiguous reshape (free)
    w2d = weight.reshape(cout, cin)
    b2d = bias.reshape(cout, 1)

    kernel = functools.partial(_conv1x1_pad1_add_kernel,
                               h=h, w=w, wp=wp, cin=cin)
    vmem = functools.partial(pl.BlockSpec, memory_space=pltpu.MemorySpace.VMEM)

    out_flat = pl.pallas_call(
        kernel,
        out_shape=jax.ShapeDtypeStruct((cout, p), x1.dtype),
        # No grid: one invocation, whole arrays resident in VMEM.
        in_specs=[vmem(), vmem(), vmem(), vmem()],
        out_specs=vmem(),
        # Reuse other's buffer for the output (same shape/dtype, fully written).
        input_output_aliases={3: 0},
    )(x_flat, w2d, b2d, other_flat)

    return out_flat.reshape(n, cout, hp, wp)


# `other` (argnum 1) is donated so the pallas-level aliasing is honored
# without XLA inserting a defensive parameter copy.
@functools.partial(jax.jit, donate_argnums=(1,))
def model_forward(x1, other, padding1, weight, bias):
    # padding1 is unused in the reference forward (dead branch) — ignored.
    del padding1
    return conv1x1_pad1_add(x1, weight, bias, other)


if __name__ == "__main__":
    key = jax.random.PRNGKey(0)
    k_x, k_other, k_w, k_b = jax.random.split(key, 4)

    # Small shapes consistent with the module: N=1, Cin=4, Cout=8, H=W=16.
    N, CIN, COUT, H, W = 1, 4, 8, 16, 16
    HP, WP = H + 2, W + 2   # 1x1 conv with padding=1 grows spatial dims by 2

    x1 = jax.random.normal(k_x, (N, CIN, H, W), dtype=jnp.float32)
    other = jax.random.normal(k_other, (N, COUT, HP, WP), dtype=jnp.float32)

    # Deterministic Conv2d(4, 8, 1) parameters (Kaiming-uniform-like bounds).
    fan_in = CIN * 1 * 1
    bound = 1.0 / (fan_in ** 0.5)
    weight = jax.random.uniform(k_w, (COUT, CIN, 1, 1), jnp.float32, -bound, bound)
    bias = jax.random.uniform(k_b, (COUT,), jnp.float32, -bound, bound)

    # Reference in plain JAX, computed BEFORE the kernel call because `other`
    # is donated to the kernel.
    x_pad = jnp.pad(x1, ((0, 0), (0, 0), (1, 1), (1, 1)))
    ref = (jnp.einsum("oc,nchw->nohw", weight.reshape(COUT, CIN), x_pad)
           + bias.reshape(1, COUT, 1, 1) + other)
    ref = jax.block_until_ready(ref)

    out = model_forward(x1, other, None, weight, bias)
    out = jax.block_until_ready(out)

    assert out.shape == (N, COUT, HP, WP)
    assert jnp.allclose(out, ref, atol=1e-5, rtol=1e-5)

    print("KERNEL_OK")
</pallas_src>

<mosaic_0001>
module attributes {stable_mosaic.version = 11 : i64} {
  func.func @_conv1x1_pad1_add_kernel(%arg0: memref<4x256xf32, #tpu.memory_space<vmem>>, %arg1: memref<8x4xf32, #tpu.memory_space<vmem>>, %arg2: memref<8x1xf32, #tpu.memory_space<vmem>>, %arg3: memref<8x324xf32, #tpu.memory_space<vmem>>, %arg4: memref<8x324xf32, #tpu.memory_space<vmem>>) attributes {dimension_semantics = [], scalar_prefetch = 0 : i64, scratch_operands = 0 : i64, tpu.core_type = #tpu.core_type<tc>} {
    %c0 = arith.constant 0 : index
    %c0_0 = arith.constant 0 : index
    %0 = vector.load %arg3[%c0, %c0_0] : memref<8x324xf32, #tpu.memory_space<vmem>>, vector<8x324xf32>
    %c0_1 = arith.constant 0 : index
    %c0_2 = arith.constant 0 : index
    %1 = vector.load %arg2[%c0_1, %c0_2] : memref<8x1xf32, #tpu.memory_space<vmem>>, vector<8x1xf32>
    %2 = vector.broadcast %1 : vector<8x1xf32> to vector<8x324xf32>
    %3 = arith.addf %0, %2 : vector<8x324xf32>
    %c0_3 = arith.constant 0 : index
    %c0_4 = arith.constant 0 : index
    %4 = vector.load %arg4[%c0_3, %c0_4] : memref<8x324xf32, #tpu.memory_space<vmem>>, vector<8x324xf32>
    tpu.vector_store %arg4[%c0_3, %c0_4], %3 {strides = array<i32>} : memref<8x324xf32, #tpu.memory_space<vmem>>, vector<8x324xf32>,
    %c0_5 = arith.constant 0 : index
    %c0_6 = arith.constant 0 : index
    %5 = vector.load %arg0[%c0_5, %c0_6] : memref<4x256xf32, #tpu.memory_space<vmem>>, vector<4x256xf32>
    %c0_7 = arith.constant 0 : index
    %c0_8 = arith.constant 0 : index
    %6 = vector.load %arg1[%c0_7, %c0_8] : memref<8x4xf32, #tpu.memory_space<vmem>>, vector<8x4xf32>
    %7 = vector.extract_strided_slice %6 {offsets = [0, 0], sizes = [8, 1], strides = [1, 1]} : vector<8x4xf32> to vector<8x1xf32>
    %8 = vector.extract_strided_slice %5 {offsets = [0, 0], sizes = [1, 256], strides = [1, 1]} : vector<4x256xf32> to vector<1x256xf32>
    %9 = vector.broadcast %7 : vector<8x1xf32> to vector<8x256xf32>
    %10 = vector.broadcast %8 : vector<1x256xf32> to vector<8x256xf32>
    %11 = arith.mulf %9, %10 : vector<8x256xf32>
    %12 = vector.extract_strided_slice %6 {offsets = [0, 1], sizes = [8, 1], strides = [1, 1]} : vector<8x4xf32> to vector<8x1xf32>
    %13 = vector.extract_strided_slice %5 {offsets = [1, 0], sizes = [1, 256], strides = [1, 1]} : vector<4x256xf32> to vector<1x256xf32>
    %14 = vector.broadcast %12 : vector<8x1xf32> to vector<8x256xf32>
    %15 = vector.broadcast %13 : vector<1x256xf32> to vector<8x256xf32>
    %16 = arith.mulf %14, %15 : vector<8x256xf32>
    %17 = arith.addf %11, %16 : vector<8x256xf32>
    %18 = vector.extract_strided_slice %6 {offsets = [0, 2], sizes = [8, 1], strides = [1, 1]} : vector<8x4xf32> to vector<8x1xf32>
    %19 = vector.extract_strided_slice %5 {offsets = [2, 0], sizes = [1, 256], strides = [1, 1]} : vector<4x256xf32> to vector<1x256xf32>
    %20 = vector.broadcast %18 : vector<8x1xf32> to vector<8x256xf32>
    %21 = vector.broadcast %19 : vector<1x256xf32> to vector<8x256xf32>
    %22 = arith.mulf %20, %21 : vector<8x256xf32>
    %23 = arith.addf %17, %22 : vector<8x256xf32>
    %24 = vector.extract_strided_slice %6 {offsets = [0, 3], sizes = [8, 1], strides = [1, 1]} : vector<8x4xf32> to vector<8x1xf32>
    %25 = vector.extract_strided_slice %5 {offsets = [3, 0], sizes = [1, 256], strides = [1, 1]} : vector<4x256xf32> to vector<1x256xf32>
    %26 = vector.broadcast %24 : vector<8x1xf32> to vector<8x256xf32>
    %27 = vector.broadcast %25 : vector<1x256xf32> to vector<8x256xf32>
    %28 = arith.mulf %26, %27 : vector<8x256xf32>
    %29 = arith.addf %23, %28 : vector<8x256xf32>
    %30 = vector.extract_strided_slice %29 {offsets = [0, 0], sizes = [8, 16], strides = [1, 1]} : vector<8x256xf32> to vector<8x16xf32>
    %31 = vector.extract_strided_slice %3 {offsets = [0, 19], sizes = [8, 16], strides = [1, 1]} : vector<8x324xf32> to vector<8x16xf32>
    %32 = arith.addf %30, %31 : vector<8x16xf32>
    %c0_9 = arith.constant 0 : index
    %c19 = arith.constant 19 : index
    %33 = vector.load %arg4[%c0_9, %c19] : memref<8x324xf32, #tpu.memory_space<vmem>>, vector<8x16xf32>
    tpu.vector_store %arg4[%c0_9, %c19], %32 {strides = array<i32>} : memref<8x324xf32, #tpu.memory_space<vmem>>, vector<8x16xf32>,
    %34 = vector.extract_strided_slice %29 {offsets = [0, 16], sizes = [8, 16], strides = [1, 1]} : vector<8x256xf32> to vector<8x16xf32>
    %35 = vector.extract_strided_slice %3 {offsets = [0, 37], sizes = [8, 16], strides = [1, 1]} : vector<8x324xf32> to vector<8x16xf32>
    %36 = arith.addf %34, %35 : vector<8x16xf32>
    %c0_10 = arith.constant 0 : index
    %c37 = arith.constant 37 : index
    %37 = vector.load %arg4[%c0_10, %c37] : memref<8x324xf32, #tpu.memory_space<vmem>>, vector<8x16xf32>
    tpu.vector_store %arg4[%c0_10, %c37], %36 {strides = array<i32>} : memref<8x324xf32, #tpu.memory_space<vmem>>, vector<8x16xf32>,
    %38 = vector.extract_strided_slice %29 {offsets = [0, 32], sizes = [8, 16], strides = [1, 1]} : vector<8x256xf32> to vector<8x16xf32>
    %39 = vector.extract_strided_slice %3 {offsets = [0, 55], sizes = [8, 16], strides = [1, 1]} : vector<8x324xf32> to vector<8x16xf32>
    %40 = arith.addf %38, %39 : vector<8x16xf32>
    %c0_11 = arith.constant 0 : index
    %c55 = arith.constant 55 : index
    %41 = vector.load %arg4[%c0_11, %c55] : memref<8x324xf32, #tpu.memory_space<vmem>>, vector<8x16xf32>
    tpu.vector_store %arg4[%c0_11, %c55], %40 {strides = array<i32>} : memref<8x324xf32, #tpu.memory_space<vmem>>, vector<8x16xf32>,
    %42 = vector.extract_strided_slice %29 {offsets = [0, 48], sizes = [8, 16], strides = [1, 1]} : vector<8x256xf32> to vector<8x16xf32>
    %43 = vector.extract_strided_slice %3 {offsets = [0, 73], sizes = [8, 16], strides = [1, 1]} : vector<8x324xf32> to vector<8x16xf32>
    %44 = arith.addf %42, %43 : vector<8x16xf32>
    %c0_12 = arith.constant 0 : index
    %c73 = arith.constant 73 : index
    %45 = vector.load %arg4[%c0_12, %c73] : memref<8x324xf32, #tpu.memory_space<vmem>>, vector<8x16xf32>
    tpu.vector_store %arg4[%c0_12, %c73], %44 {strides = array<i32>} : memref<8x324xf32, #tpu.memory_space<vmem>>, vector<8x16xf32>,
    %46 = vector.extract_strided_slice %29 {offsets = [0, 64], sizes = [8, 16], strides = [1, 1]} : vector<8x256xf32> to vector<8x16xf32>
    %47 = vector.extract_strided_slice %3 {offsets = [0, 91], sizes = [8, 16], strides = [1, 1]} : vector<8x324xf32> to vector<8x16xf32>
    %48 = arith.addf %46, %47 : vector<8x16xf32>
    %c0_13 = arith.constant 0 : index
    %c91 = arith.constant 91 : index
    %49 = vector.load %arg4[%c0_13, %c91] : memref<8x324xf32, #tpu.memory_space<vmem>>, vector<8x16xf32>
    tpu.vector_store %arg4[%c0_13, %c91], %48 {strides = array<i32>} : memref<8x324xf32, #tpu.memory_space<vmem>>, vector<8x16xf32>,
    %50 = vector.extract_strided_slice %29 {offsets = [0, 80], sizes = [8, 16], strides = [1, 1]} : vector<8x256xf32> to vector<8x16xf32>
    %51 = vector.extract_strided_slice %3 {offsets = [0, 109], sizes = [8, 16], strides = [1, 1]} : vector<8x324xf32> to vector<8x16xf32>
    %52 = arith.addf %50, %51 : vector<8x16xf32>
    %c0_14 = arith.constant 0 : index
    %c109 = arith.constant 109 : index
    %53 = vector.load %arg4[%c0_14, %c109] : memref<8x324xf32, #tpu.memory_space<vmem>>, vector<8x16xf32>
    tpu.vector_store %arg4[%c0_14, %c109], %52 {strides = array<i32>} : memref<8x324xf32, #tpu.memory_space<vmem>>, vector<8x16xf32>,
    %54 = vector.extract_strided_slice %29 {offsets = [0, 96], sizes = [8, 16], strides = [1, 1]} : vector<8x256xf32> to vector<8x16xf32>
    %55 = vector.extract_strided_slice %3 {offsets = [0, 127], sizes = [8, 16], strides = [1, 1]} : vector<8x324xf32> to vector<8x16xf32>
    %56 = arith.addf %54, %55 : vector<8x16xf32>
    %c0_15 = arith.constant 0 : index
    %c127 = arith.constant 127 : index
    %57 = vector.load %arg4[%c0_15, %c127] : memref<8x324xf32, #tpu.memory_space<vmem>>, vector<8x16xf32>
    tpu.vector_store %arg4[%c0_15, %c127], %56 {strides = array<i32>} : memref<8x324xf32, #tpu.memory_space<vmem>>, vector<8x16xf32>,
    %58 = vector.extract_strided_slice %29 {offsets = [0, 112], sizes = [8, 16], strides = [1, 1]} : vector<8x256xf32> to vector<8x16xf32>
    %59 = vector.extract_strided_slice %3 {offsets = [0, 145], sizes = [8, 16], strides = [1, 1]} : vector<8x324xf32> to vector<8x16xf32>
    %60 = arith.addf %58, %59 : vector<8x16xf32>
    %c0_16 = arith.constant 0 : index
    %c145 = arith.constant 145 : index
    %61 = vector.load %arg4[%c0_16, %c145] : memref<8x324xf32, #tpu.memory_space<vmem>>, vector<8x16xf32>
    tpu.vector_store %arg4[%c0_16, %c145], %60 {strides = array<i32>} : memref<8x324xf32, #tpu.memory_space<vmem>>, vector<8x16xf32>,
    %62 = vector.extract_strided_slice %29 {offsets = [0, 128], sizes = [8, 16], strides = [1, 1]} : vector<8x256xf32> to vector<8x16xf32>
    %63 = vector.extract_strided_slice %3 {offsets = [0, 163], sizes = [8, 16], strides = [1, 1]} : vector<8x324xf32> to vector<8x16xf32>
    %64 = arith.addf %62, %63 : vector<8x16xf32>
    %c0_17 = arith.constant 0 : index
    %c163 = arith.constant 163 : index
    %65 = vector.load %arg4[%c0_17, %c163] : memref<8x324xf32, #tpu.memory_space<vmem>>, vector<8x16xf32>
    tpu.vector_store %arg4[%c0_17, %c163], %64 {strides = array<i32>} : memref<8x324xf32, #tpu.memory_space<vmem>>, vector<8x16xf32>,
    %66 = vector.extract_strided_slice %29 {offsets = [0, 144], sizes = [8, 16], strides = [1, 1]} : vector<8x256xf32> to vector<8x16xf32>
    %67 = vector.extract_strided_slice %3 {offsets = [0, 181], sizes = [8, 16], strides = [1, 1]} : vector<8x324xf32> to vector<8x16xf32>
    %68 = arith.addf %66, %67 : vector<8x16xf32>
    %c0_18 = arith.constant 0 : index
    %c181 = arith.constant 181 : index
    %69 = vector.load %arg4[%c0_18, %c181] : memref<8x324xf32, #tpu.memory_space<vmem>>, vector<8x16xf32>
    tpu.vector_store %arg4[%c0_18, %c181], %68 {strides = array<i32>} : memref<8x324xf32, #tpu.memory_space<vmem>>, vector<8x16xf32>,
    %70 = vector.extract_strided_slice %29 {offsets = [0, 160], sizes = [8, 16], strides = [1, 1]} : vector<8x256xf32> to vector<8x16xf32>
    %71 = vector.extract_strided_slice %3 {offsets = [0, 199], sizes = [8, 16], strides = [1, 1]} : vector<8x324xf32> to vector<8x16xf32>
    %72 = arith.addf %70, %71 : vector<8x16xf32>
    %c0_19 = arith.constant 0 : index
    %c199 = arith.constant 199 : index
    %73 = vector.load %arg4[%c0_19, %c199] : memref<8x324xf32, #tpu.memory_space<vmem>>, vector<8x16xf32>
    tpu.vector_store %arg4[%c0_19, %c199], %72 {strides = array<i32>} : memref<8x324xf32, #tpu.memory_space<vmem>>, vector<8x16xf32>,
    %74 = vector.extract_strided_slice %29 {offsets = [0, 176], sizes = [8, 16], strides = [1, 1]} : vector<8x256xf32> to vector<8x16xf32>
    %75 = vector.extract_strided_slice %3 {offsets = [0, 217], sizes = [8, 16], strides = [1, 1]} : vector<8x324xf32> to vector<8x16xf32>
    %76 = arith.addf %74, %75 : vector<8x16xf32>
    %c0_20 = arith.constant 0 : index
    %c217 = arith.constant 217 : index
    %77 = vector.load %arg4[%c0_20, %c217] : memref<8x324xf32, #tpu.memory_space<vmem>>, vector<8x16xf32>
    tpu.vector_store %arg4[%c0_20, %c217], %76 {strides = array<i32>} : memref<8x324xf32, #tpu.memory_space<vmem>>, vector<8x16xf32>,
    %78 = vector.extract_strided_slice %29 {offsets = [0, 192], sizes = [8, 16], strides = [1, 1]} : vector<8x256xf32> to vector<8x16xf32>
    %79 = vector.extract_strided_slice %3 {offsets = [0, 235], sizes = [8, 16], strides = [1, 1]} : vector<8x324xf32> to vector<8x16xf32>
    %80 = arith.addf %78, %79 : vector<8x16xf32>
    %c0_21 = arith.constant 0 : index
    %c235 = arith.constant 235 : index
    %81 = vector.load %arg4[%c0_21, %c235] : memref<8x324xf32, #tpu.memory_space<vmem>>, vector<8x16xf32>
    tpu.vector_store %arg4[%c0_21, %c235], %80 {strides = array<i32>} : memref<8x324xf32, #tpu.memory_space<vmem>>, vector<8x16xf32>,
    %82 = vector.extract_strided_slice %29 {offsets = [0, 208], sizes = [8, 16], strides = [1, 1]} : vector<8x256xf32> to vector<8x16xf32>
    %83 = vector.extract_strided_slice %3 {offsets = [0, 253], sizes = [8, 16], strides = [1, 1]} : vector<8x324xf32> to vector<8x16xf32>
    %84 = arith.addf %82, %83 : vector<8x16xf32>
    %c0_22 = arith.constant 0 : index
    %c253 = arith.constant 253 : index
    %85 = vector.load %arg4[%c0_22, %c253] : memref<8x324xf32, #tpu.memory_space<vmem>>, vector<8x16xf32>
    tpu.vector_store %arg4[%c0_22, %c253], %84 {strides = array<i32>} : memref<8x324xf32, #tpu.memory_space<vmem>>, vector<8x16xf32>,
    %86 = vector.extract_strided_slice %29 {offsets = [0, 224], sizes = [8, 16], strides = [1, 1]} : vector<8x256xf32> to vector<8x16xf32>
    %87 = vector.extract_strided_slice %3 {offsets = [0, 271], sizes = [8, 16], strides = [1, 1]} : vector<8x324xf32> to vector<8x16xf32>
    %88 = arith.addf %86, %87 : vector<8x16xf32>
    %c0_23 = arith.constant 0 : index
    %c271 = arith.constant 271 : index
    %89 = vector.load %arg4[%c0_23, %c271] : memref<8x324xf32, #tpu.memory_space<vmem>>, vector<8x16xf32>
    tpu.vector_store %arg4[%c0_23, %c271], %88 {strides = array<i32>} : memref<8x324xf32, #tpu.memory_space<vmem>>, vector<8x16xf32>,
    %90 = vector.extract_strided_slice %29 {offsets = [0, 240], sizes = [8, 16], strides = [1, 1]} : vector<8x256xf32> to vector<8x16xf32>
    %91 = vector.extract_strided_slice %3 {offsets = [0, 289], sizes = [8, 16], strides = [1, 1]} : vector<8x324xf32> to vector<8x16xf32>
    %92 = arith.addf %90, %91 : vector<8x16xf32>
    %c0_24 = arith.constant 0 : index
    %c289 = arith.constant 289 : index
    %93 = vector.load %arg4[%c0_24, %c289] : memref<8x324xf32, #tpu.memory_space<vmem>>, vector<8x16xf32>
    tpu.vector_store %arg4[%c0_24, %c289], %92 {strides = array<i32>} : memref<8x324xf32, #tpu.memory_space<vmem>>, vector<8x16xf32>,
    return
  }
}

</mosaic_0001>

<llo_original>
// kernel: model_forward.1
$region0: #{model_forward.1}
  #allocation0 [shape = 'u32[]', space=smem, size = 0x4, offset = 0x4, fixed_abs, tag = 'smem constant byte address 0x4 - core index']
  #allocation1 [shape = 'u32[72,128]{1,0:T(1,128)}', space=vmem, size = 0x9000, scoped, tag = 'internal scratch']
  %s0 = inlined_call_operand.vmem [shape: f32[4,256], index: 0, kind: input, shape index: {}]
  %s1 = inlined_call_operand.vmem [shape: f32[8,4], index: 1, kind: input, shape index: {}]
  %s2 = inlined_call_operand.vmem [shape: f32[8,1], index: 2, kind: input, shape index: {}]
  %s3 = inlined_call_operand.vmem [shape: f32[8,324], index: 3, kind: input, shape index: {}, may-alias: {3,4}]
  %s4 = inlined_call_operand.vmem [shape: f32[8,324], index: 4, kind: output, shape index: {}, may-alias: {3,4}]
  %s5 = sld [smem:[#allocation0]]
  $region26: #{model_forward.1} parent=0
    _
  %s7 = ssub.s32 1, %s5
  %s8 = scalar_select 0, %s7, %s5
  // Predicated region
  $region2: #{model_forward.1} parent=0 // pred_check
    _
  $region3: #{model_forward.1} parent=0 // pred_check_branch
    %10 = sbr.rel (0) target = $region5
  $region4: #{model_forward.1} parent=0 // pred_region
    _
  $region5: #{model_forward.1} parent=0 // pred_fallthru
    _
  // Predicated region
  $region6: #{model_forward.1} parent=0 // pred_check
    _
  $region7: #{model_forward.1} parent=0 // pred_check_branch
    %12 = sbr.rel (0) target = $region9
  $region8: #{model_forward.1} parent=0 // pred_region
    _
  $region9: #{model_forward.1} parent=0 // pred_fallthru
    _
  // Predicated region
  $region10: #{model_forward.1} parent=0 // pred_check
    _
  $region11: #{model_forward.1} parent=0 // pred_check_branch
    %14 = sbr.rel (0) target = $region13
  $region12: #{model_forward.1} parent=0 // pred_region
    _
  $region13: #{model_forward.1} parent=0 // pred_fallthru
    _
  // Predicated region
  $region14: #{model_forward.1} parent=0 // pred_check
    _
  $region15: #{model_forward.1} parent=0 // pred_check_branch
    %16 = sbr.rel (0) target = $region17
  $region16: #{model_forward.1} parent=0 // pred_region
    _
  $region17: #{model_forward.1} parent=0 // pred_fallthru
    _
  %v17 = vld [vmem:[%s3] sm:$0xff]
  %v18 = vld [vmem:[%s3 + $0x8] sm:$0xff]
  %v19 = vld [vmem:[%s3 + $0x10] sm:$0xff]
  %v20 = vld [vmem:[%s2] sm:$0xff]
  %22 = vset.pattern.permute.xlu0 0
  %23 = vperm.xlu0 %22, %v20
  %v24 = vpop.permute.xlu0 %23
  %v26 = vadd.f32 %v17, %v24
  %v27 = vadd.f32 %v18, %v24
  %v28 = vadd.f32 %v19, %v24
  %29 = vst [vmem:[%s4] sm:$0xff] %v26
  %30 = vst [vmem:[%s4 + $0x8] sm:$0xff] %v27
  %vm31 = vcmask 556032
  %32 = vst.msk [vmem:[%s4 + $0x10] sm:$0xff] %vm31, %v28
  %v33 = vld [vmem:[%s0] sm:$0xff]
  %v34 = vld [vmem:[%s1] sm:$0xff]
  %36 = vset.pattern.permute.xlu0 0
  %37 = vperm.xlu0 %36, %v34
  %v38 = vpop.permute.xlu0 %37
  %v41 = vperm.slane %v33, 0
  %v42 = vperm.slane %v33, 4
  %v45 = vperm.slane %v41, 0
  %v46 = vperm.slane %v42, 0
  %v47 = vmul.f32 %v38, %v45
  %v48 = vmul.f32 %v38, %v46
  %49 = vset.pattern.permute.xlu0 1
  %50 = vperm.xlu0 %49, %v34
  %v51 = vpop.permute.xlu0 %50
  %v53 = vperm.slane %v33, 1
  %v54 = vperm.slane %v33, 5
  %v57 = vperm.slane %v53, 1
  %v58 = vperm.slane %v54, 1
  %v59 = vmul.f32 %v51, %v57
  %v60 = vmul.f32 %v51, %v58
  %v61 = vadd.f32 %v47, %v59
  %v62 = vadd.f32 %v48, %v60
  %63 = vset.pattern.permute.xlu0 2
  %64 = vperm.xlu0 %63, %v34
  %v65 = vpop.permute.xlu0 %64
  %v67 = vperm.slane %v33, 2
  %v68 = vperm.slane %v33, 6
  %v71 = vperm.slane %v67, 2
  %v72 = vperm.slane %v68, 2
  %v73 = vmul.f32 %v65, %v71
  %v74 = vmul.f32 %v65, %v72
  %v75 = vadd.f32 %v61, %v73
  %v76 = vadd.f32 %v62, %v74
  %77 = vset.pattern.permute.xlu0 3
  %78 = vperm.xlu0 %77, %v34
  %v79 = vpop.permute.xlu0 %78
  %v81 = vperm.slane %v33, 3
  %v82 = vperm.slane %v33, 7
  %v85 = vperm.slane %v81, 3
  %v86 = vperm.slane %v82, 3
  %v87 = vmul.f32 %v79, %v85
  %v88 = vmul.f32 %v79, %v86
  %v89 = vadd.f32 %v75, %v87
  %v90 = vadd.f32 %v76, %v88
  %92 = vrot.lane.b32.xlu0 %v26, 109
  %v93 = vpop.permute.xlu0 %92
  %v95 = vadd.f32 %v89, %v93
  %97 = vrot.lane.b32.xlu0 %v95, 19
  %v98 = vpop.permute.xlu0 %97
  %vm100 = vcmask 285848
  %101 = vst.msk [vmem:[%s4] sm:$0xff] %vm100, %v98
  %102 = vrot.lane.b32.xlu0 %v26, 107
  %v103 = vpop.permute.xlu0 %102
  %v105 = vadd.f32 %v89, %v103
  %107 = vrot.lane.b32.xlu0 %v105, 21
  %v108 = vpop.permute.xlu0 %107
  %vm110 = vcmask 433448
  %111 = vst.msk [vmem:[%s4] sm:$0xff] %vm110, %v108
  %112 = vrot.lane.b32.xlu0 %v26, 105
  %v113 = vpop.permute.xlu0 %112
  %v115 = vadd.f32 %v89, %v113
  %117 = vrot.lane.b32.xlu0 %v115, 23
  %v118 = vpop.permute.xlu0 %117
  %vm120 = vcmask 581048
  %121 = vst.msk [vmem:[%s4] sm:$0xff] %vm120, %v118
  %122 = vrot.lane.b32.xlu0 %v26, 103
  %v123 = vpop.permute.xlu0 %122
  %v125 = vadd.f32 %v89, %v123
  %127 = vrot.lane.b32.xlu0 %v125, 25
  %v128 = vpop.permute.xlu0 %127
  %vm130 = vcmask 728648
  %131 = vst.msk [vmem:[%s4] sm:$0xff] %vm130, %v128
  %132 = vrot.lane.b32.xlu0 %v26, 101
  %v133 = vpop.permute.xlu0 %132
  %v135 = vadd.f32 %v89, %v133
  %137 = vrot.lane.b32.xlu0 %v135, 27
  %v138 = vpop.permute.xlu0 %137
  %vm140 = vcmask 876248
  %141 = vst.msk [vmem:[%s4] sm:$0xff] %vm140, %v138
  %142 = vrot.lane.b32.xlu0 %v26, 99
  %v143 = vpop.permute.xlu0 %142
  %v145 = vadd.f32 %v89, %v143
  %147 = vrot.lane.b32.xlu0 %v145, 29
  %v148 = vpop.permute.xlu0 %147
  %vm150 = vcmask 1023848
  %151 = vst.msk [vmem:[%s4] sm:$0xff] %vm150, %v148
  %153 = vrot.lane.b32.xlu0 %v26, 97
  %v154 = vpop.permute.xlu0 %153
  %155 = vrot.lane.b32.xlu0 %v27, 97
  %v156 = vpop.permute.xlu0 %155
  %vm157 = vcmask 793600
  %v158 = vsel %vm157, %v154, %v156
  %v160 = vadd.f32 %v89, %v158
  %162 = vrot.lane.b32.xlu0 %v160, 31
  %v163 = vpop.permute.xlu0 %162
  %vm165 = vcmask 1048568
  %166 = vst.msk [vmem:[%s4] sm:$0xff] %vm165, %v163
  %vm167 = vcmask 121856
  %168 = vst.msk [vmem:[%s4 + $0x8] sm:$0xff] %vm167, %v163
  %169 = vrot.lane.b32.xlu0 %v27, 95
  %v170 = vpop.permute.xlu0 %169
  %v172 = vadd.f32 %v89, %v170
  %174 = vrot.lane.b32.xlu0 %v172, 33
  %v175 = vpop.permute.xlu0 %174
  %vm177 = vcmask 269448
  %178 = vst.msk [vmem:[%s4 + $0x8] sm:$0xff] %vm177, %v175
  %179 = vrot.lane.b32.xlu0 %v27, 93
  %v180 = vpop.permute.xlu0 %179
  %v182 = vadd.f32 %v90, %v180
  %184 = vrot.lane.b32.xlu0 %v182, 35
  %v185 = vpop.permute.xlu0 %184
  %vm187 = vcmask 417048
  %188 = vst.msk [vmem:[%s4 + $0x8] sm:$0xff] %vm187, %v185
  %189 = vrot.lane.b32.xlu0 %v27, 91
  %v190 = vpop.permute.xlu0 %189
  %v192 = vadd.f32 %v90, %v190
  %194 = vrot.lane.b32.xlu0 %v192, 37
  %v195 = vpop.permute.xlu0 %194
  %vm197 = vcmask 564648
  %198 = vst.msk [vmem:[%s4 + $0x8] sm:$0xff] %vm197, %v195
  %199 = vrot.lane.b32.xlu0 %v27, 89
  %v200 = vpop.permute.xlu0 %199
  %v202 = vadd.f32 %v90, %v200
  %204 = vrot.lane.b32.xlu0 %v202, 39
  %v205 = vpop.permute.xlu0 %204
  %vm207 = vcmask 712248
  %208 = vst.msk [vmem:[%s4 + $0x8] sm:$0xff] %vm207, %v205
  %209 = vrot.lane.b32.xlu0 %v27, 87
  %v210 = vpop.permute.xlu0 %209
  %v212 = vadd.f32 %v90, %v210
  %214 = vrot.lane.b32.xlu0 %v212, 41
  %v215 = vpop.permute.xlu0 %214
  %vm217 = vcmask 859848
  %218 = vst.msk [vmem:[%s4 + $0x8] sm:$0xff] %vm217, %v215
  %219 = vrot.lane.b32.xlu0 %v27, 85
  %v220 = vpop.permute.xlu0 %219
  %v222 = vadd.f32 %v90, %v220
  %224 = vrot.lane.b32.xlu0 %v222, 43
  %v225 = vpop.permute.xlu0 %224
  %vm227 = vcmask 1007448
  %228 = vst.msk [vmem:[%s4 + $0x8] sm:$0xff] %vm227, %v225
  %230 = vrot.lane.b32.xlu0 %v27, 83
  %v231 = vpop.permute.xlu0 %230
  %232 = vrot.lane.b32.xlu0 %v28, 83
  %v233 = vpop.permute.xlu0 %232
  %vm234 = vcmask 678912
  %v235 = vsel %vm234, %v231, %v233
  %v237 = vadd.f32 %v90, %v235
  %239 = vrot.lane.b32.xlu0 %v237, 45
  %v240 = vpop.permute.xlu0 %239
  %vm242 = vcmask 1048552
  %243 = vst.msk [vmem:[%s4 + $0x8] sm:$0xff] %vm242, %v240
  %vm244 = vcmask 105472
  %245 = vst.msk [vmem:[%s4 + $0x10] sm:$0xff] %vm244, %v240
  %246 = vrot.lane.b32.xlu0 %v28, 81
  %v247 = vpop.permute.xlu0 %246
  %v249 = vadd.f32 %v90, %v247
  %251 = vrot.lane.b32.xlu0 %v249, 47
  %v252 = vpop.permute.xlu0 %251
  %vm254 = vcmask 253048
  %255 = vst.msk [vmem:[%s4 + $0x10] sm:$0xff] %vm254, %v252
  %256 = vrot.lane.b32.xlu0 %v28, 79
  %v257 = vpop.permute.xlu0 %256
  %v259 = vadd.f32 %v90, %v257
  %261 = vrot.lane.b32.xlu0 %v259, 49
  %v262 = vpop.permute.xlu0 %261
  %vm264 = vcmask 400648
  %265 = vst.msk [vmem:[%s4 + $0x10] sm:$0xff] %vm264, %v262
  // Predicated region
  $region18: #{model_forward.1} parent=0 // pred_check
    _
  $region19: #{model_forward.1} parent=0 // pred_check_branch
    %267 = sbr.rel (0) target = $region21
  $region20: #{model_forward.1} parent=0 // pred_region
    _
  $region21: #{model_forward.1} parent=0 // pred_fallthru
    _
  // Predicated region
  $region22: #{model_forward.1} parent=0 // pred_check
    _
  $region23: #{model_forward.1} parent=0 // pred_check_branch
    %269 = sbr.rel (0) target = $region25
  $region24: #{model_forward.1} parent=0 // pred_region
    _
  $region25: #{model_forward.1} parent=0 // pred_fallthru
    _

</llo_original>
